<compile_context>
chip_gen: v7x
topology: tpu7x:2x2x1
jax: 0.10.0
libtpu: 0.0.40
codegen_flags: <defaults>
</compile_context>

<pallas_src>
import functools
import math

import jax
import jax.numpy as jnp
from jax import lax
from jax.experimental import pallas as pl
from jax.experimental.pallas import tpu as pltpu


_TINY = 1e-37  # guards rsqrt(0); torch clamps ||x||*||y|| at eps, dot is 0 anyway


@functools.lru_cache(maxsize=None)
def _vmem_limit_bytes():
    """Scoped-VMEM limit per generation (v5e/v6e: 128 MiB phys, v7x: 64 MiB)."""
    cap = 64 * 1024 * 1024
    try:
        cap = int(pltpu.get_tpu_info().vmem_capacity_bytes)
    except Exception:  # off-device / API drift — fall back to a safe default
        pass
    # 64 MiB scoped on v5e/v6e, ~48 MiB on v7x, never below 32 MiB.
    return max(32 * 1024 * 1024, min(cap - 16 * 1024 * 1024, 64 * 1024 * 1024))


# ---------------------------------------------------------------------------
# Kernels
# ---------------------------------------------------------------------------

def _inv_norm_kernel(x_ref, o_ref, *, tiny):
    """Prologue: inverse L2 norm per row.  x_ref (tile, D) -> o_ref (tile, 1)."""
    x = x_ref[...].astype(jnp.float32)
    n2 = jnp.sum(x * x, axis=-1, keepdims=True)
    o_ref[...] = lax.rsqrt(jnp.maximum(n2, tiny))


def _cosine_matrix_kernel(x_ref, y_ref, inv_nx_ref, inv_ny_ref, o_ref, *,
                          inv_temp, inv_eps):
    """One (tm, tn) tile, full D.  x_ref (1,tm,D), y_ref (1,tn,D)."""
    dots = lax.dot_general(x_ref[0], y_ref[0], (((1,), (1,)), ((), ())),
                           preferred_element_type=jnp.float32)
    # min(1/(||x||*||y||), 1/eps) == 1/max(||x||*||y||, eps)  (torch semantics)
    scale = jnp.minimum(inv_nx_ref[0] * inv_ny_ref[0], inv_eps)
    o_ref[0] = (dots * scale * inv_temp).astype(o_ref.dtype)


def _cosine_matrix_ktiled_kernel(x_ref, y_ref, inv_nx_ref, inv_ny_ref, o_ref,
                                 acc_ref, *, inv_temp, inv_eps):
    """K-tiled variant: grid (B, Mi, Nj, Kk), f32 accumulator scratch."""
    k = pl.program_id(3)

    @pl.when(k == 0)
    def _init():
        acc_ref[...] = jnp.zeros_like(acc_ref)

    acc_ref[...] += lax.dot_general(x_ref[0], y_ref[0], (((1,), (1,)), ((), ())),
                                    preferred_element_type=jnp.float32)

    @pl.when(k == pl.num_programs(3) - 1)
    def _finalize():
        scale = jnp.minimum(inv_nx_ref[0] * inv_ny_ref[0], inv_eps)
        o_ref[0] = (acc_ref[...] * scale * inv_temp).astype(o_ref.dtype)


def _cosine_rows_kernel(x_ref, y_ref, o_ref, *, inv_temp, inv_eps, tiny, chunk):
    """Row-wise cosine: (tile_n, D) x (tile_n, D) -> (1, tile_n) lane-dense.

    Processed in static `chunk`-row sub-chunks so the lane-sparse (rows, 1)
    reduction intermediates never exceed the 64-vreg budget.
    """
    nrows = x_ref.shape[0]
    for r in range(0, nrows, chunk):
        x = x_ref[r:r + chunk, :].astype(jnp.float32)
        y = y_ref[r:r + chunk, :].astype(jnp.float32)
        dot = jnp.sum(x * y, axis=-1, keepdims=True)
        inv_nx = lax.rsqrt(jnp.maximum(jnp.sum(x * x, axis=-1, keepdims=True), tiny))
        inv_ny = lax.rsqrt(jnp.maximum(jnp.sum(y * y, axis=-1, keepdims=True), tiny))
        cos = dot * jnp.minimum(inv_nx * inv_ny, inv_eps) * inv_temp
        o_ref[:, r:r + chunk] = jnp.transpose(cos).astype(o_ref.dtype)


# ---------------------------------------------------------------------------
# Wrappers
# ---------------------------------------------------------------------------

def _inv_norms(rows2d, vmem_limit, tiny=_TINY):
    """Inverse L2 norm of every row of rows2d (n, D) -> (n, 1) f32."""
    n, d = rows2d.shape
    itemsize = rows2d.dtype.itemsize
    budget = vmem_limit // 4
    cap = max(8, budget // (2 * d * itemsize))
    if n <= cap:
        tile = n
    else:
        tile = max(8, (min(cap, 1024) // 8) * 8)
    num_tiles = pl.cdiv(n, tile)

    out = pl.pallas_call(
        functools.partial(_inv_norm_kernel, tiny=float(tiny)),
        out_shape=jax.ShapeDtypeStruct((num_tiles * tile, 1), jnp.float32),
        grid_spec=pltpu.PrefetchScalarGridSpec(
            num_scalar_prefetch=0,
            grid=(num_tiles,),
            in_specs=[pl.BlockSpec((tile, d), lambda i: (i, 0))],
            out_specs=pl.BlockSpec((tile, 1), lambda i: (i, 0)),
        ),
        compiler_params=pltpu.CompilerParams(
            dimension_semantics=("parallel",),
            vmem_limit_bytes=vmem_limit,
        ),
    )(rows2d)
    return out[:n]


def _choose_matrix_tiles(M, N, D, in_itemsize, out_itemsize, vmem_limit):
    budget = (vmem_limit * 3) // 4

    def fits(tm, tn, tk):
        inputs = 2 * (tm + tn) * tk * in_itemsize            # double-buffered
        outputs = 2 * tm * tn * out_itemsize + tm * tn * 4    # out + f32 acc
        return inputs + outputs <= budget

    tm = M if M < 256 else 256
    tn = N if N < 256 else 256

    # Prefer full-D tiles: with a single K step, x stays grid-resident across j.
    if fits(tm, tn, D):
        return tm, tn, D

    # K-tile with a 128-multiple divisor of D (ragged K would pollute outputs).
    c = min(2048, (D // 128) * 128)
    while c >= 128:
        if D % c == 0 and fits(tm, tn, c):
            return tm, tn, c
        c -= 128

    # Last resort: full D, shrink tn first (x is the reused operand), then tm.
    tk = D
    while tn > 128 and not fits(tm, tn, tk):
        tn = max(128, ((tn // 2) // 128) * 128)
    while tm > 8 and not fits(tm, tn, tk):
        tm = max(8, ((tm // 2) // 8) * 8)
    return tm, tn, tk


def _cosine_matrix(xm, ym, temp, eps, out_dtype):
    """Batched pairwise cosine / temp: xm (B,M,D), ym (B,N,D) -> (B,M,N)."""
    B, M, D = xm.shape
    _, N, _ = ym.shape

    # Feed the MXU natively when both inputs are bf16 (f32 accumulate);
    # never silently downcast f32 inputs.
    if xm.dtype == jnp.bfloat16 and ym.dtype == jnp.bfloat16:
        comp_dtype = jnp.bfloat16
    else:
        comp_dtype = jnp.float32
    xm = xm.astype(comp_dtype)
    ym = ym.astype(comp_dtype)

    vmem_limit = _vmem_limit_bytes()
    tm, tn, tk = _choose_matrix_tiles(
        M, N, D, jnp.dtype(comp_dtype).itemsize, jnp.dtype(out_dtype).itemsize,
        vmem_limit)

    # v7x megacore: make sure a parallel axis has >= 2 blocks when the problem
    # is big enough to matter (harmless elsewhere).
    if B * pl.cdiv(M, tm) * pl.cdiv(N, tn) == 1 and M >= 256:
        tm = 128

    # Hoisted inverse norms: rsqrt once per row, not once per output element.
    inv_nx = _inv_norms(xm.reshape(B * M, D), vmem_limit).reshape(B, M, 1)
    inv_ny = _inv_norms(ym.reshape(B * N, D), vmem_limit).reshape(B, 1, N)

    inv_temp = 1.0 / float(temp)
    inv_eps = 1.0 / float(eps)
    nk = D // tk if tk != D else 1
    grid_m = pl.cdiv(M, tm)
    grid_n = pl.cdiv(N, tn)

    # TODO(synk): pipeline_mode=pl.Buffered(3) on the streamed y spec when
    # VMEM headroom exists (left at the default depth for compile safety).
    if nk == 1:
        kernel = functools.partial(_cosine_matrix_kernel,
                                   inv_temp=inv_temp, inv_eps=inv_eps)
        grid = (B, grid_m, grid_n)
        in_specs = [
            pl.BlockSpec((1, tm, D), lambda b, i, j: (b, i, 0)),
            pl.BlockSpec((1, tn, D), lambda b, i, j: (b, j, 0)),
            pl.BlockSpec((1, tm, 1), lambda b, i, j: (b, i, 0)),
            pl.BlockSpec((1, 1, tn), lambda b, i, j: (b, 0, j)),
        ]
        out_specs = pl.BlockSpec((1, tm, tn), lambda b, i, j: (b, i, j))
        scratch_shapes = []
        dims = ("parallel", "parallel", "parallel")
    else:
        kernel = functools.partial(_cosine_matrix_ktiled_kernel,
                                   inv_temp=inv_temp, inv_eps=inv_eps)
        grid = (B, grid_m, grid_n, nk)
        in_specs = [
            pl.BlockSpec((1, tm, tk), lambda b, i, j, k: (b, i, k)),
            pl.BlockSpec((1, tn, tk), lambda b, i, j, k: (b, j, k)),
            pl.BlockSpec((1, tm, 1), lambda b, i, j, k: (b, i, 0)),
            pl.BlockSpec((1, 1, tn), lambda b, i, j, k: (b, 0, j)),
        ]
        out_specs = pl.BlockSpec((1, tm, tn), lambda b, i, j, k: (b, i, j))
        scratch_shapes = [pltpu.VMEM((tm, tn), jnp.float32)]
        dims = ("parallel", "parallel", "parallel", "arbitrary")

    return pl.pallas_call(
        kernel,
        out_shape=jax.ShapeDtypeStruct((B, M, N), out_dtype),
        grid_spec=pltpu.PrefetchScalarGridSpec(
            num_scalar_prefetch=0,
            grid=grid,
            in_specs=in_specs,
            out_specs=out_specs,
            scratch_shapes=scratch_shapes,
        ),
        compiler_params=pltpu.CompilerParams(
            dimension_semantics=dims,
            vmem_limit_bytes=vmem_limit,
        ),
    )(xm, ym, inv_nx, inv_ny)


def _cosine_rows(x2, y2, temp, eps, out_dtype):
    """Row-wise cosine / temp of x2 (n, D) vs y2 (n, D) -> (n,)."""
    n, d = x2.shape
    itemsize = max(x2.dtype.itemsize, y2.dtype.itemsize)
    vmem_limit = _vmem_limit_bytes()

    budget = (vmem_limit * 3) // 4               # 2 inputs x 2 pipeline buffers
    cap = max(128, budget // (4 * d * itemsize))
    tile_rows = min(4096, cap)
    if n <= tile_rows:
        tile_n = max(n, 1)                        # single full-extent tile
    else:
        tile_n = max(128, (tile_rows // 128) * 128)  # lane-dense output width
    num_tiles = pl.cdiv(n, tile_n)                # ragged last tile is masked
    chunk = 128 if tile_n % 128 == 0 else tile_n  # in-kernel vreg-friendly chunks

    kernel = functools.partial(
        _cosine_rows_kernel,
        inv_temp=1.0 / float(temp),
        inv_eps=1.0 / float(eps),
        tiny=float(_TINY),
        chunk=chunk,
    )
    out = pl.pallas_call(
        kernel,
        out_shape=jax.ShapeDtypeStruct((1, num_tiles * tile_n), out_dtype),
        grid_spec=pltpu.PrefetchScalarGridSpec(
            num_scalar_prefetch=0,
            grid=(num_tiles,),
            in_specs=[
                pl.BlockSpec((tile_n, d), lambda i: (i, 0)),
                pl.BlockSpec((tile_n, d), lambda i: (i, 0)),
            ],
            out_specs=pl.BlockSpec((1, tile_n), lambda i: (0, i)),
        ),
        compiler_params=pltpu.CompilerParams(
            dimension_semantics=("parallel",),
            vmem_limit_bytes=vmem_limit,
        ),
    )(x2, y2)
    return out.reshape(-1)[:n]


def similarity(x, y, temp, *, eps=1e-8):
    """Pallas equivalent of Similarity.forward(x, y) = cos(x, y, dim=-1) / temp."""
    x = jnp.asarray(x)
    y = jnp.asarray(y)

    rdt = jnp.result_type(x.dtype, y.dtype)
    out_dtype = rdt if jnp.issubdtype(rdt, jnp.floating) else jnp.float32

    # Right-align ranks (numpy/torch broadcasting) so the pattern checks below
    # see both operands with the same ndim.
    if x.ndim < y.ndim:
        x = x.reshape((1,) * (y.ndim - x.ndim) + x.shape)
    elif y.ndim < x.ndim:
        y = y.reshape((1,) * (x.ndim - y.ndim) + y.shape)

    if x.ndim >= 3 and x.shape[-1] == y.shape[-1]:
        D = x.shape[-1]
        batch_x, batch_y = x.shape[:-3], y.shape[:-3]

        # Pattern A (CL4KT/SimCSE): x (...,M,1,D) vs y (...,1,N,D) -> (...,M,N)
        if x.shape[-2] == 1 and y.shape[-3] == 1:
            M, N = x.shape[-3], y.shape[-2]
            batch = jnp.broadcast_shapes(batch_x, batch_y)
            # TODO(synk): size-1 batch broadcast is materialized here; could be
            # avoided with a clamped batch index_map.
            xr = jnp.broadcast_to(jnp.squeeze(x, -2), batch + (M, D))
            yr = jnp.broadcast_to(jnp.squeeze(y, -3), batch + (N, D))
            B = int(math.prod(batch)) if batch else 1
            out = _cosine_matrix(xr.reshape(B, M, D), yr.reshape(B, N, D),
                                 temp, eps, out_dtype)
            return out.reshape(batch + (M, N))

        # Pattern B (swapped): x (...,1,N,D) vs y (...,M,1,D) -> (...,M,N)
        if x.shape[-3] == 1 and y.shape[-2] == 1:
            M, N = y.shape[-3], x.shape[-2]
            batch = jnp.broadcast_shapes(batch_x, batch_y)
            xr = jnp.broadcast_to(jnp.squeeze(y, -2), batch + (M, D))
            yr = jnp.broadcast_to(jnp.squeeze(x, -3), batch + (N, D))
            B = int(math.prod(batch)) if batch else 1
            out = _cosine_matrix(xr.reshape(B, M, D), yr.reshape(B, N, D),
                                 temp, eps, out_dtype)
            return out.reshape(batch + (M, N))

    # General fallback: full PyTorch broadcasting semantics, row-wise kernel.
    # TODO(synk): this materializes the broadcast in HBM; outer-product shapes
    # are already routed to the MXU matrix path above.
    xb, yb = jnp.broadcast_arrays(x, y)
    lead = xb.shape[:-1]
    d = xb.shape[-1]
    n = int(math.prod(lead)) if lead else 1
    out = _cosine_rows(xb.reshape(n, d), yb.reshape(n, d), temp, eps, out_dtype)
    return out.reshape(lead)


if __name__ == "__main__":
    temp = 0.05

    def ref_cos(x, y, temp, eps=1e-8):
        xb, yb = jnp.broadcast_arrays(x, y)
        num = jnp.sum(xb * yb, axis=-1)
        den = jnp.maximum(jnp.linalg.norm(xb, axis=-1)
                          * jnp.linalg.norm(yb, axis=-1), eps)
        return num / den / temp

    key = jax.random.PRNGKey(0)
    k1, k2, k3, k4, k5, k6 = jax.random.split(key, 6)

    # 1) CL4KT / SimCSE usage: x (B, 1, D) vs y (1, B, D) -> (B, B)
    B, D = 8, 32
    x = jax.random.normal(k1, (B, 1, D), dtype=jnp.float32)
    y = jax.random.normal(k2, (1, B, D), dtype=jnp.float32)
    out = jax.block_until_ready(similarity(x, y, temp))
    ref = ref_cos(x, y, temp)
    assert out.shape == (B, B), out.shape
    assert jnp.allclose(out, ref, atol=1e-3, rtol=1e-3), (
        float(jnp.max(jnp.abs(out - ref))))

    # 2) Swapped orientation: x (1, N, D) vs y (M, 1, D) -> (M, N)
    M, N = 6, 10
    x = jax.random.normal(k3, (1, N, D), dtype=jnp.float32)
    y = jax.random.normal(k4, (M, 1, D), dtype=jnp.float32)
    out = jax.block_until_ready(similarity(x, y, temp))
    ref = ref_cos(x, y, temp)
    assert out.shape == (M, N), out.shape
    assert jnp.allclose(out, ref, atol=1e-3, rtol=1e-3), (
        float(jnp.max(jnp.abs(out - ref))))

    # 3) Batched 4-D outer pattern: (Bb, M, 1, D) vs (Bb, 1, N, D)
    Bb = 2
    x = jax.random.normal(k5, (Bb, 5, 1, 16), dtype=jnp.float32)
    y = jax.random.normal(k6, (Bb, 1, 7, 16), dtype=jnp.float32)
    out = jax.block_until_ready(similarity(x, y, temp))
    ref = ref_cos(x, y, temp)
    assert out.shape == (Bb, 5, 7), out.shape
    assert jnp.allclose(out, ref, atol=1e-3, rtol=1e-3), (
        float(jnp.max(jnp.abs(out - ref))))

    # 4) General same-shape broadcast (row-wise fallback kernel)
    xg = jax.random.normal(k1, (2, B, D), dtype=jnp.float32)
    yg = jax.random.normal(k2, (2, B, D), dtype=jnp.float32)
    out = jax.block_until_ready(similarity(xg, yg, temp))
    ref = ref_cos(xg, yg, temp)
    assert out.shape == (2, B), out.shape
    assert jnp.allclose(out, ref, atol=1e-3, rtol=1e-3), (
        float(jnp.max(jnp.abs(out - ref))))

    print("KERNEL_OK")
</pallas_src>

<mosaic_0001>
module attributes {stable_mosaic.version = 11 : i64} {
  func.func @_inv_norm_kernel(%arg0: i32, %arg1: memref<8x32xf32, #tpu.memory_space<vmem>>, %arg2: memref<8x1xf32, #tpu.memory_space<vmem>>) attributes {dimension_semantics = [#tpu.dimension_semantics<parallel>], iteration_bounds = array<i64: 1>, scalar_prefetch = 0 : i64, scratch_operands = 0 : i64, tpu.core_type = #tpu.core_type<tc>, window_params = [{transform_indices = @transform_0, window_bounds = array<i64: 8, 32>}, {transform_indices = @transform_1, window_bounds = array<i64: 8, 1>}]} {
    %c0 = arith.constant 0 : index
    %c0_0 = arith.constant 0 : index
    %0 = vector.load %arg1[%c0, %c0_0] : memref<8x32xf32, #tpu.memory_space<vmem>>, vector<8x32xf32>
    %1 = arith.mulf %0, %0 : vector<8x32xf32>
    %cst = arith.constant dense<0.000000e+00> : vector<8xf32>
    %2 = vector.multi_reduction <add>, %1, %cst [1] : vector<8x32xf32> to vector<8xf32>
    %3 = vector.shape_cast %2 : vector<8xf32> to vector<8x1xf32>
    %cst_1 = arith.constant 9.99999991E-38 : f32
    %4 = vector.broadcast %cst_1 : f32 to vector<8x1xf32>
    %5 = arith.maximumf %3, %4 : vector<8x1xf32>
    %6 = math.rsqrt %5 : vector<8x1xf32>
    %c0_2 = arith.constant 0 : index
    %c0_3 = arith.constant 0 : index
    %7 = vector.load %arg2[%c0_2, %c0_3] : memref<8x1xf32, #tpu.memory_space<vmem>>, vector<8x1xf32>
    tpu.vector_store %arg2[%c0_2, %c0_3], %6 {strides = array<i32>} : memref<8x1xf32, #tpu.memory_space<vmem>>, vector<8x1xf32>,
    return
  }
  func.func @transform_0(%arg0: i32) -> (i32, i32) {
    %c0_i32 = arith.constant 0 : i32
    %c0_i32_0 = arith.constant 0 : i32
    return %arg0, %c0_i32 : i32, i32
  }
  func.func @transform_1(%arg0: i32) -> (i32, i32) {
    %c0_i32 = arith.constant 0 : i32
    %c0_i32_0 = arith.constant 0 : i32
    return %arg0, %c0_i32 : i32, i32
  }
}

</mosaic_0001>

<llo_original>
// kernel: tpu_custom_call.1
$region0: #{tpu_custom_call.1}
  #allocation0 [shape = 'u32[]', space=smem, size = 0x4, offset = 0x4, fixed_abs, tag = 'smem constant byte address 0x4 - core index']
  #allocation1 [shape = 'u32[144,128]{1,0:T(1,128)}', space=vmem, size = 0x12000, scoped, tag = 'internal scratch']
  %s0 = inlined_call_operand.hbm [shape: f32[8,32], index: 0, kind: input, shape index: {}]
  %s1 = inlined_call_operand.vmem [shape: f32[8,1], index: 1, kind: output, shape index: {}]
  %s2 = sld [smem:[#allocation0]]
  $region18: #{tpu_custom_call.1} parent=0
    _
  %s4 = ssub.s32 1, %s2
  %s5 = scalar_select 0, %s4, %s2
  $region1: #{tpu_custom_call.1} parent=0
    #allocation2 [shape = 'u8[4096]{0}', space=vmem, size = 0x1000, scoped, tag = 'input window, operand 0, single buffered']
    #allocation3 [shape = 's32[1]{0}', space=sflag, size = 0x4, scoped, tag = 'scoped memory for tpu_custom_call.1']
    %6 = vsyncpa [#allocation3], 0
    // Predicated region
    $region2: #{tpu_custom_call.1} parent=1 // pred_check
      _
    $region3: #{tpu_custom_call.1} parent=1 // pred_check_branch
      %8 = sbr.rel (0) target = $region5
    $region4: #{tpu_custom_call.1} parent=1 // pred_region
      %s10 = ssub.s32 128, 128
      %11 = vsyncadd [#allocation3], %s10
      %s13 = sshll.u32 [#allocation2], 4
      %s14 = int_to_ptr.vmem [resolvable:$true] %s13
      %16 = dma.hbm_to_vmem [thread:$0]  %s0, 128, %s14, [#allocation3]
    $region5: #{tpu_custom_call.1} parent=1 // pred_fallthru
      _
    // Predicated region
    $region6: #{tpu_custom_call.1} parent=1 // pred_check
      _
    $region7: #{tpu_custom_call.1} parent=1 // pred_check_branch
      %18 = sbr.rel (0) target = $region9
    $region8: #{tpu_custom_call.1} parent=1 // pred_region
      %19 = dma.done [#allocation3], 128
    $region9: #{tpu_custom_call.1} parent=1 // pred_fallthru
      _
    %v20 = vld [vmem:[#allocation2] sm:$0xff]
    %v21 = vmul.f32 %v20, %v20
    %vm22 = vcmask 261120
    %v23 = vsel %vm22, %v21, 0.0
    %24 = vadd.xlane.f32.xlu0 %v23
    %v25 = vpop.xlane.xlu0 %24
    %v26 = vmax.f32 %v25, 1e-37
    %v27 = vrsqrt.pop %v26
    %vm28 = vcmask 7168
    %29 = vst.msk [vmem:[%s1] sm:$0xff] %vm28, %v27
    // Predicated region
    $region10: #{tpu_custom_call.1} parent=1 // pred_check
      _
    $region11: #{tpu_custom_call.1} parent=1 // pred_check_branch
      %31 = sbr.rel (0) target = $region13
    $region12: #{tpu_custom_call.1} parent=1 // pred_region
      _
    $region13: #{tpu_custom_call.1} parent=1 // pred_fallthru
      _
    // Predicated region
    $region14: #{tpu_custom_call.1} parent=1 // pred_check
      _
    $region15: #{tpu_custom_call.1} parent=1 // pred_check_branch
      %33 = sbr.rel (0) target = $region17
    $region16: #{tpu_custom_call.1} parent=1 // pred_region
      _
    $region17: #{tpu_custom_call.1} parent=1 // pred_fallthru
      _
    %34 = vsyncpa [#allocation3], 1

</llo_original>
